<compile_context>
chip_gen: v5e
topology: v5e:2x2
jax: 0.10.0
libtpu: 0.0.40
codegen_flags: <defaults>
</compile_context>

<pallas_src>
import jax
import jax.numpy as jnp
from jax.experimental import pallas as pl
from jax.experimental.pallas import tpu as pltpu


def _reversible_block_kernel(x_ref, wf_ref, bf_ref, wg_ref, bg_ref, y_ref):
    """One row-tile of the reversible block.

    x_ref          : (TM, 2*Dp)  fused input tile  (x1 | x2)
    wf_ref, wg_ref : (Dp, Dp)    linear weights for f and g (VMEM-resident)
    bf_ref, bg_ref : (1, Dp)     biases
    y_ref          : (TM, 2*Dp)  fused output tile (y1 | y2)
    """
    Dp = wf_ref.shape[0]
    x1 = x_ref[:, :Dp]
    x2 = x_ref[:, Dp:]

    # y1 = x1 + f(x2),  f(x) = x @ Wf + bf   (f32 accumulation on the MXU)
    f_out = jnp.dot(x2, wf_ref[...], preferred_element_type=jnp.float32)
    y1 = x1.astype(jnp.float32) + f_out + bf_ref[...].astype(jnp.float32)

    # y2 = x2 + g(y1),  g(x) = x @ Wg + bg
    # (y1 is downcast to the parameter dtype before the second matmul; for
    # bf16 params this matches standard mixed-precision Linear behaviour.)
    g_out = jnp.dot(y1.astype(wg_ref.dtype), wg_ref[...],
                    preferred_element_type=jnp.float32)
    y2 = x2.astype(jnp.float32) + g_out + bg_ref[...].astype(jnp.float32)

    # Direct half stores into the already-resident output block.  Dp is a
    # multiple of 128 (or the full extent), so both stores are full-lane vst.
    y_ref[:, :Dp] = y1.astype(y_ref.dtype)
    y_ref[:, Dp:] = y2.astype(y_ref.dtype)

    # TODO(synk): for very large D (MXU-bound regime) split TM into sub-chunks
    # so f(chunk k+1) overlaps g(chunk k); not needed at these sizes.


_SUBLANE = {4: 8, 2: 16, 1: 32}  # native sublane packing per itemsize


def _vmem_capacity_bytes():
    try:
        return int(pltpu.get_tpu_info().vmem_capacity_bytes)
    except Exception:
        return 64 * 1024 * 1024  # conservative fallback (v7x per-TC VMEM)


def _pick_row_tile(M, dp, in_itemsize, out_itemsize, w_itemsize):
    """Return (tm, vmem_limit_bytes) for the row-tiled pipeline."""
    sub = _SUBLANE.get(in_itemsize, 8)
    two_dp = 2 * dp

    def rdown(v):
        return max(sub, (v // sub) * sub)

    def rup(v):
        return ((v + sub - 1) // sub) * sub

    cap = _vmem_capacity_bytes()
    budget = int(cap * 0.6)  # headroom vs. physical VMEM (64/128 MiB per TC)

    # Weights + biases; counted double-buffered for safety (the call may fall
    # back to default pipelining if single-buffering is unsupported).
    w_bytes = 2 * (dp * dp + dp) * w_itemsize
    w_resident = 2 * w_bytes

    # Per-row VMEM cost: double-buffered x/y tiles + f32 live intermediates
    # (f_out / y1 / g_out / y2).
    per_row = (2 * two_dp * in_itemsize
               + 2 * two_dp * out_itemsize
               + 4 * dp * 4)

    avail = max(budget - w_resident, per_row * sub)
    tm_vmem = rdown(avail // per_row)

    # Never bigger than the whole problem.
    tm = min(tm_vmem, rup(M))

    # Amortize the ~0.35us per-grid-step overhead: target >= ~2 MiB of input
    # bytes per tile (HBM-bound regime for narrow features)...
    tm_amort = rup(max(1, pl.cdiv(2 << 20, two_dp * in_itemsize)))
    # ...but keep >= 8 independent tiles when M is large enough so the
    # "parallel" grid axis can be sharded across v7x's two TensorCores.
    tm_split = rup(max(1, pl.cdiv(M, 8)))
    tm = max(sub, min(tm, max(tm_split, min(tm_amort, tm_vmem))))

    footprint = per_row * tm + w_resident
    vmem_limit = int(min(cap * 0.9,
                         max(32 * 1024 * 1024, footprint * 1.5 + (4 << 20))))
    return tm, vmem_limit


def _call_pallas(x2d, wf_p, bf2, wg_p, bg2, tm, vmem_limit,
                 single_buffer_weights):
    M, two_dp = x2d.shape
    dp = two_dp // 2
    grid = (pl.cdiv(M, tm),)

    # Constant index_map -> weights stay VMEM-resident across all grid steps;
    # a single buffer halves their VMEM footprint vs default double-buffering.
    w_kwargs = dict(pipeline_mode=pl.Buffered(1)) if single_buffer_weights else {}

    in_specs = [
        pl.BlockSpec((tm, two_dp), lambda i: (i, 0)),            # x tile
        pl.BlockSpec((dp, dp), lambda i: (0, 0), **w_kwargs),    # Wf
        pl.BlockSpec((1, dp), lambda i: (0, 0), **w_kwargs),     # bf
        pl.BlockSpec((dp, dp), lambda i: (0, 0), **w_kwargs),    # Wg
        pl.BlockSpec((1, dp), lambda i: (0, 0), **w_kwargs),     # bg
    ]

    in_itemsize = jnp.dtype(x2d.dtype).itemsize
    w_itemsize = jnp.dtype(wf_p.dtype).itemsize
    cost = pl.CostEstimate(
        flops=4 * M * dp * dp,            # two (M,Dp)x(Dp,Dp) matmuls
        transcendentals=0,
        bytes_accessed=(2 * M * two_dp * in_itemsize
                        + 2 * (dp * dp + dp) * w_itemsize),
    )

    return pl.pallas_call(
        _reversible_block_kernel,
        out_shape=jax.ShapeDtypeStruct((M, two_dp), x2d.dtype),
        grid_spec=pltpu.PrefetchScalarGridSpec(
            num_scalar_prefetch=0,
            grid=grid,
            in_specs=in_specs,
            out_specs=pl.BlockSpec((tm, two_dp), lambda i: (i, 0)),
        ),
        compiler_params=pltpu.CompilerParams(
            dimension_semantics=("parallel",),  # row tiles are independent
            vmem_limit_bytes=vmem_limit,
        ),
        cost_estimate=cost,
    )(x2d, wf_p, bf2, wg_p, bg2)


def reversible_block_forward(x, wf, bf, wg, bg):
    """Forward pass of ReversibleBlock (eval mode, f/g = Linear(D, D)).

    x  : (B, N, 2*D)
    wf : (D, D), bf : (D,)   -- parameters of f
    wg : (D, D), bg : (D,)   -- parameters of g
    returns (y, f_loss, g_loss) with y : (B, N, 2*D)
    """
    B, N, two_d = x.shape
    D = two_d // 2
    M = B * N

    # Pad the per-half feature width to a multiple of 128 lanes so in-kernel
    # half slices/stores are full-lane.  Zero-padded weight rows/cols and
    # zero-padded bias lanes keep the math exact; padded lanes are dropped on
    # the way out.
    Dp = max(128, ((D + 127) // 128) * 128)
    if Dp == D:
        x2d = x.reshape(M, two_d)
        wf_p, wg_p = wf, wg
        bf2, bg2 = bf.reshape(1, D), bg.reshape(1, D)
    else:
        pad = Dp - D
        x1p = jnp.pad(x[..., :D], ((0, 0), (0, 0), (0, pad)))
        x2p = jnp.pad(x[..., D:], ((0, 0), (0, 0), (0, pad)))
        x2d = jnp.concatenate([x1p, x2p], axis=-1).reshape(M, 2 * Dp)
        wf_p = jnp.pad(wf, ((0, pad), (0, pad)))
        wg_p = jnp.pad(wg, ((0, pad), (0, pad)))
        bf2 = jnp.pad(bf, (0, pad)).reshape(1, Dp)
        bg2 = jnp.pad(bg, (0, pad)).reshape(1, Dp)

    in_itemsize = jnp.dtype(x.dtype).itemsize
    w_itemsize = jnp.dtype(wf.dtype).itemsize
    tm, vmem_limit = _pick_row_tile(M, Dp, in_itemsize, in_itemsize, w_itemsize)

    # TODO(synk): K-tiled grid axis + f32 accumulator for D so large that the
    # two (Dp, Dp) weights no longer fit the VMEM budget; not implemented.

    try:
        y2d = _call_pallas(x2d, wf_p, bf2, wg_p, bg2, tm, vmem_limit,
                           single_buffer_weights=True)
    except Exception:
        # pipeline_mode=pl.Buffered(1) unsupported on this JAX version ->
        # fall back to default double-buffered weight specs.
        y2d = _call_pallas(x2d, wf_p, bf2, wg_p, bg2, tm, vmem_limit,
                           single_buffer_weights=False)

    if Dp == D:
        y = y2d.reshape(B, N, two_d)
    else:
        yp = y2d.reshape(B, N, 2 * Dp)
        y = jnp.concatenate([yp[..., :D], yp[..., Dp:Dp + D]], axis=-1)

    # cast_return: f/g return plain tensors -> zero auxiliary losses.
    f_loss = jnp.zeros((), dtype=x.dtype)
    g_loss = jnp.zeros((), dtype=x.dtype)
    return y, f_loss, g_loss

    # TODO(synk): backward_pass (manual reversible gradient reconstruction) is
    # training-only autograd machinery, not part of the forward kernel;
    # Deterministic's RNG record/replay is a no-op here since f/g are
    # deterministic Linear layers.


def _reference_forward(x, wf, bf, wg, bg):
    """Pure-JAX reference for correctness checking."""
    D = x.shape[-1] // 2
    x1, x2 = x[..., :D], x[..., D:]
    y1 = x1 + (x2 @ wf + bf)
    y2 = x2 + (y1 @ wg + bg)
    return jnp.concatenate([y1, y2], axis=-1)


if __name__ == "__main__":
    key = jax.random.PRNGKey(0)

    def run_case(B, N, D, dtype=jnp.float32):
        kx, kwf, kbf, kwg, kbg = jax.random.split(jax.random.fold_in(key, D), 5)
        x = jax.random.normal(kx, (B, N, 2 * D), dtype=dtype)
        wf = jax.random.normal(kwf, (D, D), dtype=dtype) * 0.02
        bf = jax.random.normal(kbf, (D,), dtype=dtype) * 0.02
        wg = jax.random.normal(kwg, (D, D), dtype=dtype) * 0.02
        bg = jax.random.normal(kbg, (D,), dtype=dtype) * 0.02

        y, f_loss, g_loss = reversible_block_forward(x, wf, bf, wg, bg)
        jax.block_until_ready((y, f_loss, g_loss))

        y_ref = _reference_forward(x, wf, bf, wg, bg)
        assert y.shape == (B, N, 2 * D), y.shape
        assert f_loss.shape == () and g_loss.shape == ()
        assert jnp.allclose(y, y_ref, atol=1e-4, rtol=1e-4), (
            f"mismatch vs reference (D={D})")
        assert float(f_loss) == 0.0 and float(g_loss) == 0.0

    # Small shapes consistent with the module: batch=2, seq=8, per-half D=32
    # (padded path, D % 128 != 0) and D=128 (lane-aligned path, no padding).
    run_case(B=2, N=8, D=32)
    run_case(B=2, N=8, D=128)

    print("KERNEL_OK")
</pallas_src>

<mosaic_0001>
module attributes {stable_mosaic.version = 11 : i64} {
  func.func @_reversible_block_kernel(%arg0: i32, %arg1: memref<16x256xf32, #tpu.memory_space<vmem>>, %arg2: memref<128x128xf32, #tpu.memory_space<vmem>>, %arg3: memref<1x128xf32, #tpu.memory_space<vmem>>, %arg4: memref<128x128xf32, #tpu.memory_space<vmem>>, %arg5: memref<1x128xf32, #tpu.memory_space<vmem>>, %arg6: memref<16x256xf32, #tpu.memory_space<vmem>>) attributes {dimension_semantics = [#tpu.dimension_semantics<parallel>], iteration_bounds = array<i64: 1>, scalar_prefetch = 0 : i64, scratch_operands = 0 : i64, tpu.core_type = #tpu.core_type<tc>, window_params = [{transform_indices = @transform_0, window_bounds = array<i64: 16, 256>}, {pipeline_mode = #tpu.pipeline_mode<synchronous>, transform_indices = @transform_1, window_bounds = array<i64: 128, 128>}, {pipeline_mode = #tpu.pipeline_mode<synchronous>, transform_indices = @transform_2, window_bounds = array<i64: 1, 128>}, {pipeline_mode = #tpu.pipeline_mode<synchronous>, transform_indices = @transform_3, window_bounds = array<i64: 128, 128>}, {pipeline_mode = #tpu.pipeline_mode<synchronous>, transform_indices = @transform_4, window_bounds = array<i64: 1, 128>}, {transform_indices = @transform_5, window_bounds = array<i64: 16, 256>}]} {
    %c0 = arith.constant 0 : index
    %c0_0 = arith.constant 0 : index
    %0 = vector.load %arg1[%c0, %c0_0] : memref<16x256xf32, #tpu.memory_space<vmem>>, vector<16x128xf32>
    %c0_1 = arith.constant 0 : index
    %c128 = arith.constant 128 : index
    %1 = vector.load %arg1[%c0_1, %c128] : memref<16x256xf32, #tpu.memory_space<vmem>>, vector<16x128xf32>
    %c0_2 = arith.constant 0 : index
    %c0_3 = arith.constant 0 : index
    %2 = vector.load %arg2[%c0_2, %c0_3] : memref<128x128xf32, #tpu.memory_space<vmem>>, vector<128x128xf32>
    %cst = arith.constant dense<0.000000e+00> : vector<16x128xf32>
    %3 = tpu.matmul %1, %2, %cst {dimension_numbers = #tpu.dot_dimension_numbers<[1], [0], [0], [1], [0, 0, 1, 1], [], []>} : vector<16x128xf32>, vector<128x128xf32>, vector<16x128xf32> -> vector<16x128xf32>
    %4 = arith.addf %0, %3 : vector<16x128xf32>
    %c0_4 = arith.constant 0 : index
    %c0_5 = arith.constant 0 : index
    %5 = vector.load %arg3[%c0_4, %c0_5] : memref<1x128xf32, #tpu.memory_space<vmem>>, vector<1x128xf32>
    %6 = vector.broadcast %5 : vector<1x128xf32> to vector<16x128xf32>
    %7 = arith.addf %4, %6 : vector<16x128xf32>
    %c0_6 = arith.constant 0 : index
    %c0_7 = arith.constant 0 : index
    %8 = vector.load %arg4[%c0_6, %c0_7] : memref<128x128xf32, #tpu.memory_space<vmem>>, vector<128x128xf32>
    %cst_8 = arith.constant dense<0.000000e+00> : vector<16x128xf32>
    %9 = tpu.matmul %7, %8, %cst_8 {dimension_numbers = #tpu.dot_dimension_numbers<[1], [0], [0], [1], [0, 0, 1, 1], [], []>} : vector<16x128xf32>, vector<128x128xf32>, vector<16x128xf32> -> vector<16x128xf32>
    %10 = arith.addf %1, %9 : vector<16x128xf32>
    %c0_9 = arith.constant 0 : index
    %c0_10 = arith.constant 0 : index
    %11 = vector.load %arg5[%c0_9, %c0_10] : memref<1x128xf32, #tpu.memory_space<vmem>>, vector<1x128xf32>
    %12 = vector.broadcast %11 : vector<1x128xf32> to vector<16x128xf32>
    %13 = arith.addf %10, %12 : vector<16x128xf32>
    %c0_11 = arith.constant 0 : index
    %c0_12 = arith.constant 0 : index
    %14 = vector.load %arg6[%c0_11, %c0_12] : memref<16x256xf32, #tpu.memory_space<vmem>>, vector<16x128xf32>
    tpu.vector_store %arg6[%c0_11, %c0_12], %7 {strides = array<i32>} : memref<16x256xf32, #tpu.memory_space<vmem>>, vector<16x128xf32>,
    %c0_13 = arith.constant 0 : index
    %c128_14 = arith.constant 128 : index
    %15 = vector.load %arg6[%c0_13, %c128_14] : memref<16x256xf32, #tpu.memory_space<vmem>>, vector<16x128xf32>
    tpu.vector_store %arg6[%c0_13, %c128_14], %13 {strides = array<i32>} : memref<16x256xf32, #tpu.memory_space<vmem>>, vector<16x128xf32>,
    return
  }
  func.func @transform_0(%arg0: i32) -> (i32, i32) {
    %c0_i32 = arith.constant 0 : i32
    %c0_i32_0 = arith.constant 0 : i32
    return %arg0, %c0_i32 : i32, i32
  }
  func.func @transform_1(%arg0: i32) -> (i32, i32) {
    %c0_i32 = arith.constant 0 : i32
    %c0_i32_0 = arith.constant 0 : i32
    %c0_i32_1 = arith.constant 0 : i32
    return %c0_i32, %c0_i32_0 : i32, i32
  }
  func.func @transform_2(%arg0: i32) -> (i32, i32) {
    %c0_i32 = arith.constant 0 : i32
    %c0_i32_0 = arith.constant 0 : i32
    %c0_i32_1 = arith.constant 0 : i32
    return %c0_i32, %c0_i32_0 : i32, i32
  }
  func.func @transform_3(%arg0: i32) -> (i32, i32) {
    %c0_i32 = arith.constant 0 : i32
    %c0_i32_0 = arith.constant 0 : i32
    %c0_i32_1 = arith.constant 0 : i32
    return %c0_i32, %c0_i32_0 : i32, i32
  }
  func.func @transform_4(%arg0: i32) -> (i32, i32) {
    %c0_i32 = arith.constant 0 : i32
    %c0_i32_0 = arith.constant 0 : i32
    %c0_i32_1 = arith.constant 0 : i32
    return %c0_i32, %c0_i32_0 : i32, i32
  }
  func.func @transform_5(%arg0: i32) -> (i32, i32) {
    %c0_i32 = arith.constant 0 : i32
    %c0_i32_0 = arith.constant 0 : i32
    return %arg0, %c0_i32 : i32, i32
  }
}

module attributes {stable_mosaic.version = 11 : i64} {
  func.func @_reversible_block_kernel(%arg0: i32, %arg1: memref<16x256xf32, #tpu.memory_space<vmem>>, %arg2: memref<128x128xf32, #tpu.memory_space<vmem>>, %arg3: memref<1x128xf32, #tpu.memory_space<vmem>>, %arg4: memref<128x128xf32, #tpu.memory_space<vmem>>, %arg5: memref<1x128xf32, #tpu.memory_space<vmem>>, %arg6: memref<16x256xf32, #tpu.memory_space<vmem>>) attributes {dimension_semantics = [#tpu.dimension_semantics<parallel>], iteration_bounds = array<i64: 1>, scalar_prefetch = 0 : i64, scratch_operands = 0 : i64, tpu.core_type = #tpu.core_type<tc>, window_params = [{transform_indices = @transform_0, window_bounds = array<i64: 16, 256>}, {pipeline_mode = #tpu.pipeline_mode<synchronous>, transform_indices = @transform_1, window_bounds = array<i64: 128, 128>}, {pipeline_mode = #tpu.pipeline_mode<synchronous>, transform_indices = @transform_2, window_bounds = array<i64: 1, 128>}, {pipeline_mode = #tpu.pipeline_mode<synchronous>, transform_indices = @transform_3, window_bounds = array<i64: 128, 128>}, {pipeline_mode = #tpu.pipeline_mode<synchronous>, transform_indices = @transform_4, window_bounds = array<i64: 1, 128>}, {transform_indices = @transform_5, window_bounds = array<i64: 16, 256>}]} {
    %c0 = arith.constant 0 : index
    %c0_0 = arith.constant 0 : index
    %0 = vector.load %arg1[%c0, %c0_0] : memref<16x256xf32, #tpu.memory_space<vmem>>, vector<16x128xf32>
    %c0_1 = arith.constant 0 : index
    %c128 = arith.constant 128 : index
    %1 = vector.load %arg1[%c0_1, %c128] : memref<16x256xf32, #tpu.memory_space<vmem>>, vector<16x128xf32>
    %c0_2 = arith.constant 0 : index
    %c0_3 = arith.constant 0 : index
    %2 = vector.load %arg2[%c0_2, %c0_3] : memref<128x128xf32, #tpu.memory_space<vmem>>, vector<128x128xf32>
    %cst = arith.constant dense<0.000000e+00> : vector<16x128xf32>
    %3 = tpu.matmul %1, %2, %cst {dimension_numbers = #tpu.dot_dimension_numbers<[1], [0], [0], [1], [0, 0, 1, 1], [], []>} : vector<16x128xf32>, vector<128x128xf32>, vector<16x128xf32> -> vector<16x128xf32>
    %4 = arith.addf %0, %3 : vector<16x128xf32>
    %c0_4 = arith.constant 0 : index
    %c0_5 = arith.constant 0 : index
    %5 = vector.load %arg3[%c0_4, %c0_5] : memref<1x128xf32, #tpu.memory_space<vmem>>, vector<1x128xf32>
    %6 = vector.broadcast %5 : vector<1x128xf32> to vector<16x128xf32>
    %7 = arith.addf %4, %6 : vector<16x128xf32>
    %c0_6 = arith.constant 0 : index
    %c0_7 = arith.constant 0 : index
    %8 = vector.load %arg4[%c0_6, %c0_7] : memref<128x128xf32, #tpu.memory_space<vmem>>, vector<128x128xf32>
    %cst_8 = arith.constant dense<0.000000e+00> : vector<16x128xf32>
    %9 = tpu.matmul %7, %8, %cst_8 {dimension_numbers = #tpu.dot_dimension_numbers<[1], [0], [0], [1], [0, 0, 1, 1], [], []>} : vector<16x128xf32>, vector<128x128xf32>, vector<16x128xf32> -> vector<16x128xf32>
    %10 = arith.addf %1, %9 : vector<16x128xf32>
    %c0_9 = arith.constant 0 : index
    %c0_10 = arith.constant 0 : index
    %11 = vector.load %arg5[%c0_9, %c0_10] : memref<1x128xf32, #tpu.memory_space<vmem>>, vector<1x128xf32>
    %12 = vector.broadcast %11 : vector<1x128xf32> to vector<16x128xf32>
    %13 = arith.addf %10, %12 : vector<16x128xf32>
    %c0_11 = arith.constant 0 : index
    %c0_12 = arith.constant 0 : index
    %14 = vector.load %arg6[%c0_11, %c0_12] : memref<16x256xf32, #tpu.memory_space<vmem>>, vector<16x128xf32>
    tpu.vector_store %arg6[%c0_11, %c0_12], %7 {strides = array<i32>} : memref<16x256xf32, #tpu.memory_space<vmem>>, vector<16x128xf32>,
    %c0_13 = arith.constant 0 : index
    %c128_14 = arith.constant 128 : index
    %15 = vector.load %arg6[%c0_13, %c128_14] : memref<16x256xf32, #tpu.memory_space<vmem>>, vector<16x128xf32>
    tpu.vector_store %arg6[%c0_13, %c128_14], %13 {strides = array<i32>} : memref<16x256xf32, #tpu.memory_space<vmem>>, vector<16x128xf32>,
    return
  }
  func.func @transform_0(%arg0: i32) -> (i32, i32) {
    %c0_i32 = arith.constant 0 : i32
    %c0_i32_0 = arith.constant 0 : i32
    return %arg0, %c0_i32 : i32, i32
  }
  func.func @transform_1(%arg0: i32) -> (i32, i32) {
    %c0_i32 = arith.constant 0 : i32
    %c0_i32_0 = arith.constant 0 : i32
    %c0_i32_1 = arith.constant 0 : i32
    return %c0_i32, %c0_i32_0 : i32, i32
  }
  func.func @transform_2(%arg0: i32) -> (i32, i32) {
    %c0_i32 = arith.constant 0 : i32
    %c0_i32_0 = arith.constant 0 : i32
    %c0_i32_1 = arith.constant 0 : i32
    return %c0_i32, %c0_i32_0 : i32, i32
  }
  func.func @transform_3(%arg0: i32) -> (i32, i32) {
    %c0_i32 = arith.constant 0 : i32
    %c0_i32_0 = arith.constant 0 : i32
    %c0_i32_1 = arith.constant 0 : i32
    return %c0_i32, %c0_i32_0 : i32, i32
  }
  func.func @transform_4(%arg0: i32) -> (i32, i32) {
    %c0_i32 = arith.constant 0 : i32
    %c0_i32_0 = arith.constant 0 : i32
    %c0_i32_1 = arith.constant 0 : i32
    return %c0_i32, %c0_i32_0 : i32, i32
  }
  func.func @transform_5(%arg0: i32) -> (i32, i32) {
    %c0_i32 = arith.constant 0 : i32
    %c0_i32_0 = arith.constant 0 : i32
    return %arg0, %c0_i32 : i32, i32
  }
}

</mosaic_0001>

<llo_original>
// kernel: tpu_custom_call.1
$region0: #{tpu_custom_call.1}
  #allocation0 [shape = 'u32[]', space=smem, size = 0x4, offset = 0x4, fixed_abs, tag = 'smem constant byte address 0x4 - core index']
  #allocation1 [shape = 'u32[72,128]{1,0:T(1,128)}', space=vmem, size = 0x9000, scoped, tag = 'internal scratch']
  %s0 = inlined_call_operand.hbm [shape: f32[16,256], index: 0, kind: input, shape index: {}]
  %s1 = inlined_call_operand.hbm [shape: f32[128,128], index: 1, kind: input, shape index: {}]
  %s2 = inlined_call_operand.vmem [shape: f32[1,128], index: 2, kind: input, shape index: {}]
  %s3 = inlined_call_operand.hbm [shape: f32[128,128], index: 3, kind: input, shape index: {}]
  %s4 = inlined_call_operand.vmem [shape: f32[1,128], index: 4, kind: input, shape index: {}]
  %s5 = inlined_call_operand.hbm [shape: f32[16,256], index: 5, kind: output, shape index: {}]
  %s6 = sld [smem:[#allocation0]]
  $region42: #{tpu_custom_call.1} parent=0
    _
  %s8 = ssub.s32 1, %s6
  %s9 = scalar_select 0, %s8, %s6
  $region1: #{tpu_custom_call.1} parent=0
    #allocation2 [shape = 'u8[16384]{0}', space=vmem, size = 0x4000, scoped, tag = 'input window, operand 0, single buffered']
    #allocation3 [shape = 's32[1]{0}', space=sflag, size = 0x4, scoped, tag = 'scoped memory for tpu_custom_call.1']
    #allocation4 [shape = 's32[1]{0}', space=sflag, size = 0x4, scoped, tag = 'scoped memory for tpu_custom_call.1']
    #allocation5 [shape = 'u8[65536]{0}', space=vmem, size = 0x10000, scoped, tag = 'input window, operand 1, single buffered']
    #allocation6 [shape = 's32[1]{0}', space=sflag, size = 0x4, scoped, tag = 'scoped memory for tpu_custom_call.1']
    #allocation7 [shape = 'u8[65536]{0}', space=vmem, size = 0x10000, scoped, tag = 'input window, operand 3, single buffered']
    #allocation8 [shape = 'u8[16384]{0}', space=vmem, size = 0x4000, scoped, tag = 'output window, operand 0, single buffered']
    %10 = vsyncpa [#allocation3], 0
    %11 = vsyncpa [#allocation6], 0
    %12 = vsyncpa [#allocation4], 0
    // Predicated region
    $region2: #{tpu_custom_call.1} parent=1 // pred_check
      _
    $region3: #{tpu_custom_call.1} parent=1 // pred_check_branch
      %14 = sbr.rel (0) target = $region5
    $region4: #{tpu_custom_call.1} parent=1 // pred_region
      %16 = vsyncadd [#allocation3], 0
      %s17 = sshll.u32 %s0, 4
      %s18 = int_to_ptr.hbm [resolvable:$true] %s17
      %s19 = sshll.u32 [#allocation2], 4
      %s20 = int_to_ptr.vmem [resolvable:$true] %s19
      %25 = dma.hbm_to_vmem [thread:$0]  %s18, 512, %s20, [#allocation3], 256, 256, 16
    $region5: #{tpu_custom_call.1} parent=1 // pred_fallthru
      _
    // Predicated region
    $region6: #{tpu_custom_call.1} parent=1 // pred_check
      _
    $region7: #{tpu_custom_call.1} parent=1 // pred_check_branch
      %27 = sbr.rel (0) target = $region9
    $region8: #{tpu_custom_call.1} parent=1 // pred_region
      %29 = vsyncadd [#allocation6], 0
      %s30 = sshll.u32 %s1, 4
      %s31 = int_to_ptr.hbm [resolvable:$true] %s30
      %s32 = sshll.u32 [#allocation5], 4
      %s33 = int_to_ptr.vmem [resolvable:$true] %s32
      %38 = dma.hbm_to_vmem [thread:$0]  %s31, 2048, %s33, [#allocation6], 128, 128, 8
    $region9: #{tpu_custom_call.1} parent=1 // pred_fallthru
      _
    // Predicated region
    $region10: #{tpu_custom_call.1} parent=1 // pred_check
      _
    $region11: #{tpu_custom_call.1} parent=1 // pred_check_branch
      %40 = sbr.rel (0) target = $region13
    $region12: #{tpu_custom_call.1} parent=1 // pred_region
      _
    $region13: #{tpu_custom_call.1} parent=1 // pred_fallthru
      _
    // Predicated region
    $region14: #{tpu_custom_call.1} parent=1 // pred_check
      _
    $region15: #{tpu_custom_call.1} parent=1 // pred_check_branch
      %42 = sbr.rel (0) target = $region17
    $region16: #{tpu_custom_call.1} parent=1 // pred_region
      %44 = vsyncadd [#allocation6], 0
      %s45 = sshll.u32 %s3, 4
      %s46 = int_to_ptr.hbm [resolvable:$true] %s45
      %s47 = sshll.u32 [#allocation7], 4
      %s48 = int_to_ptr.vmem [resolvable:$true] %s47
      %53 = dma.hbm_to_vmem [thread:$0]  %s46, 2048, %s48, [#allocation6], 128, 128, 8
    $region17: #{tpu_custom_call.1} parent=1 // pred_fallthru
      _
    // Predicated region
    $region18: #{tpu_custom_call.1} parent=1 // pred_check
      _
    $region19: #{tpu_custom_call.1} parent=1 // pred_check_branch
      %55 = sbr.rel (0) target = $region21
    $region20: #{tpu_custom_call.1} parent=1 // pred_region
      _
    $region21: #{tpu_custom_call.1} parent=1 // pred_fallthru
      _
    // Predicated region
    $region22: #{tpu_custom_call.1} parent=1 // pred_check
      _
    $region23: #{tpu_custom_call.1} parent=1 // pred_check_branch
      %57 = sbr.rel (0) target = $region25
    $region24: #{tpu_custom_call.1} parent=1 // pred_region
      %59 = dma.done [#allocation3], 512
    $region25: #{tpu_custom_call.1} parent=1 // pred_fallthru
      _
    // Predicated region
    $region26: #{tpu_custom_call.1} parent=1 // pred_check
      _
    $region27: #{tpu_custom_call.1} parent=1 // pred_check_branch
      %61 = sbr.rel (0) target = $region29
    $region28: #{tpu_custom_call.1} parent=1 // pred_region
      %63 = dma.done [#allocation6], 2048
    $region29: #{tpu_custom_call.1} parent=1 // pred_fallthru
      _
    // Predicated region
    $region30: #{tpu_custom_call.1} parent=1 // pred_check
      _
    $region31: #{tpu_custom_call.1} parent=1 // pred_check_branch
      %65 = sbr.rel (0) target = $region33
    $region32: #{tpu_custom_call.1} parent=1 // pred_region
      %67 = dma.done [#allocation6], 2048
    $region33: #{tpu_custom_call.1} parent=1 // pred_fallthru
      _
    %v68 = vld [vmem:[#allocation2] sm:$0xff]
    %v69 = vld [vmem:[#allocation2 + $0x10] sm:$0xff]
    %v70 = vld [vmem:[#allocation2 + $0x8] sm:$0xff]
    %v71 = vld [vmem:[#allocation2 + $0x18] sm:$0xff]
    %v72 = vld [vmem:[#allocation5] sm:$0xff]
    %v73 = vld [vmem:[#allocation5 + $0x8] sm:$0xff]
    %v74 = vld [vmem:[#allocation5 + $0x10] sm:$0xff]
    %v75 = vld [vmem:[#allocation5 + $0x18] sm:$0xff]
    %v76 = vld [vmem:[#allocation5 + $0x20] sm:$0xff]
    %v77 = vld [vmem:[#allocation5 + $0x28] sm:$0xff]
    %v78 = vld [vmem:[#allocation5 + $0x30] sm:$0xff]
    %v79 = vld [vmem:[#allocation5 + $0x38] sm:$0xff]
    %v80 = vld [vmem:[#allocation5 + $0x40] sm:$0xff]
    %v81 = vld [vmem:[#allocation5 + $0x48] sm:$0xff]
    %v82 = vld [vmem:[#allocation5 + $0x50] sm:$0xff]
    %v83 = vld [vmem:[#allocation5 + $0x58] sm:$0xff]
    %v84 = vld [vmem:[#allocation5 + $0x60] sm:$0xff]
    %v85 = vld [vmem:[#allocation5 + $0x68] sm:$0xff]
    %v86 = vld [vmem:[#allocation5 + $0x70] sm:$0xff]
    %v87 = vld [vmem:[#allocation5 + $0x78] sm:$0xff]
    %88 = vmatpush.msra.mxu0 %v87
    %89 = vmatpush.msra.mxu0 %v86
    %90 = vmatpush.msra.mxu0 %v85
    %91 = vmatpush.msra.mxu0 %v84
    %92 = vmatpush.msra.mxu0 %v83
    %93 = vmatpush.msra.mxu0 %v82
    %94 = vmatpush.msra.mxu0 %v81
    %95 = vmatpush.msra.mxu0 %v80
    %96 = vmatpush.msra.mxu0 %v79
    %97 = vmatpush.msra.mxu0 %v78
    %98 = vmatpush.msra.mxu0 %v77
    %99 = vmatpush.msra.mxu0 %v76
    %100 = vmatpush.msra.mxu0 %v75
    %101 = vmatpush.msra.mxu0 %v74
    %102 = vmatpush.msra.mxu0 %v73
    %103 = vmatpush.msra.mxu0 %v72
    %104 = vmatmul.f32.gmra.mxu0 %v70
    %v105 = vpop.f32.mrf.mxu0
    %v106 = vadd.f32 0.0, %v105
    %107 = vmatmul.f32.gmra.mxu0 %v71
    %v108 = vpop.f32.mrf.mxu0
    %v109 = vadd.f32 0.0, %v108
    %110 = vdwg.mxu0
    %v111 = vadd.f32 %v68, %v106
    %v112 = vadd.f32 %v69, %v109
    %v113 = vld [vmem:[%s2] sm:$0x1]
    %v115 = vperm.slane %v113, 0
    %v117 = vadd.f32 %v111, %v115
    %v118 = vadd.f32 %v112, %v115
    %v119 = vld [vmem:[#allocation7] sm:$0xff]
    %v120 = vld [vmem:[#allocation7 + $0x8] sm:$0xff]
    %v121 = vld [vmem:[#allocation7 + $0x10] sm:$0xff]
    %v122 = vld [vmem:[#allocation7 + $0x18] sm:$0xff]
    %v123 = vld [vmem:[#allocation7 + $0x20] sm:$0xff]
    %v124 = vld [vmem:[#allocation7 + $0x28] sm:$0xff]
    %v125 = vld [vmem:[#allocation7 + $0x30] sm:$0xff]
    %v126 = vld [vmem:[#allocation7 + $0x38] sm:$0xff]
    %v127 = vld [vmem:[#allocation7 + $0x40] sm:$0xff]
    %v128 = vld [vmem:[#allocation7 + $0x48] sm:$0xff]
    %v129 = vld [vmem:[#allocation7 + $0x50] sm:$0xff]
    %v130 = vld [vmem:[#allocation7 + $0x58] sm:$0xff]
    %v131 = vld [vmem:[#allocation7 + $0x60] sm:$0xff]
    %v132 = vld [vmem:[#allocation7 + $0x68] sm:$0xff]
    %v133 = vld [vmem:[#allocation7 + $0x70] sm:$0xff]
    %v134 = vld [vmem:[#allocation7 + $0x78] sm:$0xff]
    %135 = vmatpush.msra.mxu0 %v134
    %136 = vmatpush.msra.mxu0 %v133
    %137 = vmatpush.msra.mxu0 %v132
    %138 = vmatpush.msra.mxu0 %v131
    %139 = vmatpush.msra.mxu0 %v130
    %140 = vmatpush.msra.mxu0 %v129
    %141 = vmatpush.msra.mxu0 %v128
    %142 = vmatpush.msra.mxu0 %v127
    %143 = vmatpush.msra.mxu0 %v126
    %144 = vmatpush.msra.mxu0 %v125
    %145 = vmatpush.msra.mxu0 %v124
    %146 = vmatpush.msra.mxu0 %v123
    %147 = vmatpush.msra.mxu0 %v122
    %148 = vmatpush.msra.mxu0 %v121
    %149 = vmatpush.msra.mxu0 %v120
    %150 = vmatpush.msra.mxu0 %v119
    %151 = vmatmul.f32.gmra.mxu0 %v117
    %v152 = vpop.f32.mrf.mxu0
    %v153 = vadd.f32 0.0, %v152
    %154 = vmatmul.f32.gmra.mxu0 %v118
    %v155 = vpop.f32.mrf.mxu0
    %v156 = vadd.f32 0.0, %v155
    %157 = vdwg.mxu0
    %v158 = vadd.f32 %v70, %v153
    %v159 = vadd.f32 %v71, %v156
    %v160 = vld [vmem:[%s4] sm:$0x1]
    %v162 = vperm.slane %v160, 0
    %v164 = vadd.f32 %v158, %v162
    %v165 = vadd.f32 %v159, %v162
    %166 = vst [vmem:[#allocation8] sm:$0xff] %v117
    %167 = vst [vmem:[#allocation8 + $0x10] sm:$0xff] %v118
    %168 = vst [vmem:[#allocation8 + $0x8] sm:$0xff] %v164
    %169 = vst [vmem:[#allocation8 + $0x18] sm:$0xff] %v165
    // Predicated region
    $region34: #{tpu_custom_call.1} parent=1 // pred_check
      _
    $region35: #{tpu_custom_call.1} parent=1 // pred_check_branch
      %171 = sbr.rel (0) target = $region37
    $region36: #{tpu_custom_call.1} parent=1 // pred_region
      %173 = vsyncadd [#allocation4], 0
      %s174 = sshll.u32 [#allocation8], 4
      %s175 = int_to_ptr.vmem [resolvable:$true] %s174
      %s176 = sshll.u32 %s5, 4
      %s177 = int_to_ptr.hbm [resolvable:$true] %s176
      %182 = dma.vmem_to_hbm [thread:$0]  %s175, 512, %s177, [#allocation4], 256, 256, 16
    $region37: #{tpu_custom_call.1} parent=1 // pred_fallthru
      _
    // Predicated region
    $region38: #{tpu_custom_call.1} parent=1 // pred_check
      _
    $region39: #{tpu_custom_call.1} parent=1 // pred_check_branch
      %184 = sbr.rel (0) target = $region41
    $region40: #{tpu_custom_call.1} parent=1 // pred_region
      %186 = dma.done [#allocation4], 512
    $region41: #{tpu_custom_call.1} parent=1 // pred_fallthru
      _
    %187 = vsyncpa [#allocation3], 1
    %188 = vsyncpa [#allocation6], 1
    %189 = vsyncpa [#allocation4], 1

// kernel: tpu_custom_call.1
$region0: #{tpu_custom_call.1}
  #allocation0 [shape = 'u32[]', space=smem, size = 0x4, offset = 0x4, fixed_abs, tag = 'smem constant byte address 0x4 - core index']
  #allocation1 [shape = 'u32[72,128]{1,0:T(1,128)}', space=vmem, size = 0x9000, scoped, tag = 'internal scratch']
  %s0 = inlined_call_operand.hbm [shape: f32[16,256], index: 0, kind: input, shape index: {}]
  %s1 = inlined_call_operand.hbm [shape: f32[128,128], index: 1, kind: input, shape index: {}]
  %s2 = inlined_call_operand.vmem [shape: f32[1,128], index: 2, kind: input, shape index: {}]
  %s3 = inlined_call_operand.hbm [shape: f32[128,128], index: 3, kind: input, shape index: {}]
  %s4 = inlined_call_operand.vmem [shape: f32[1,128], index: 4, kind: input, shape index: {}]
  %s5 = inlined_call_operand.hbm [shape: f32[16,256], index: 5, kind: output, shape index: {}]
  %s6 = sld [smem:[#allocation0]]
  $region42: #{tpu_custom_call.1} parent=0
    _
  %s8 = ssub.s32 1, %s6
  %s9 = scalar_select 0, %s8, %s6
  $region1: #{tpu_custom_call.1} parent=0
    #allocation2 [shape = 'u8[16384]{0}', space=vmem, size = 0x4000, scoped, tag = 'input window, operand 0, single buffered']
    #allocation3 [shape = 's32[1]{0}', space=sflag, size = 0x4, scoped, tag = 'scoped memory for tpu_custom_call.1']
    #allocation4 [shape = 's32[1]{0}', space=sflag, size = 0x4, scoped, tag = 'scoped memory for tpu_custom_call.1']
    #allocation5 [shape = 'u8[65536]{0}', space=vmem, size = 0x10000, scoped, tag = 'input window, operand 1, single buffered']
    #allocation6 [shape = 's32[1]{0}', space=sflag, size = 0x4, scoped, tag = 'scoped memory for tpu_custom_call.1']
    #allocation7 [shape = 'u8[65536]{0}', space=vmem, size = 0x10000, scoped, tag = 'input window, operand 3, single buffered']
    #allocation8 [shape = 'u8[16384]{0}', space=vmem, size = 0x4000, scoped, tag = 'output window, operand 0, single buffered']
    %10 = vsyncpa [#allocation3], 0
    %11 = vsyncpa [#allocation6], 0
    %12 = vsyncpa [#allocation4], 0
    // Predicated region
    $region2: #{tpu_custom_call.1} parent=1 // pred_check
      _
    $region3: #{tpu_custom_call.1} parent=1 // pred_check_branch
      %14 = sbr.rel (0) target = $region5
    $region4: #{tpu_custom_call.1} parent=1 // pred_region
      %16 = vsyncadd [#allocation3], 0
      %s17 = sshll.u32 %s0, 4
      %s18 = int_to_ptr.hbm [resolvable:$true] %s17
      %s19 = sshll.u32 [#allocation2], 4
      %s20 = int_to_ptr.vmem [resolvable:$true] %s19
      %25 = dma.hbm_to_vmem [thread:$0]  %s18, 512, %s20, [#allocation3], 256, 256, 16
    $region5: #{tpu_custom_call.1} parent=1 // pred_fallthru
      _
    // Predicated region
    $region6: #{tpu_custom_call.1} parent=1 // pred_check
      _
    $region7: #{tpu_custom_call.1} parent=1 // pred_check_branch
      %27 = sbr.rel (0) target = $region9
    $region8: #{tpu_custom_call.1} parent=1 // pred_region
      %29 = vsyncadd [#allocation6], 0
      %s30 = sshll.u32 %s1, 4
      %s31 = int_to_ptr.hbm [resolvable:$true] %s30
      %s32 = sshll.u32 [#allocation5], 4
      %s33 = int_to_ptr.vmem [resolvable:$true] %s32
      %38 = dma.hbm_to_vmem [thread:$0]  %s31, 2048, %s33, [#allocation6], 128, 128, 8
    $region9: #{tpu_custom_call.1} parent=1 // pred_fallthru
      _
    // Predicated region
    $region10: #{tpu_custom_call.1} parent=1 // pred_check
      _
    $region11: #{tpu_custom_call.1} parent=1 // pred_check_branch
      %40 = sbr.rel (0) target = $region13
    $region12: #{tpu_custom_call.1} parent=1 // pred_region
      _
    $region13: #{tpu_custom_call.1} parent=1 // pred_fallthru
      _
    // Predicated region
    $region14: #{tpu_custom_call.1} parent=1 // pred_check
      _
    $region15: #{tpu_custom_call.1} parent=1 // pred_check_branch
      %42 = sbr.rel (0) target = $region17
    $region16: #{tpu_custom_call.1} parent=1 // pred_region
      %44 = vsyncadd [#allocation6], 0
      %s45 = sshll.u32 %s3, 4
      %s46 = int_to_ptr.hbm [resolvable:$true] %s45
      %s47 = sshll.u32 [#allocation7], 4
      %s48 = int_to_ptr.vmem [resolvable:$true] %s47
      %53 = dma.hbm_to_vmem [thread:$0]  %s46, 2048, %s48, [#allocation6], 128, 128, 8
    $region17: #{tpu_custom_call.1} parent=1 // pred_fallthru
      _
    // Predicated region
    $region18: #{tpu_custom_call.1} parent=1 // pred_check
      _
    $region19: #{tpu_custom_call.1} parent=1 // pred_check_branch
      %55 = sbr.rel (0) target = $region21
    $region20: #{tpu_custom_call.1} parent=1 // pred_region
      _
    $region21: #{tpu_custom_call.1} parent=1 // pred_fallthru
      _
    // Predicated region
    $region22: #{tpu_custom_call.1} parent=1 // pred_check
      _
    $region23: #{tpu_custom_call.1} parent=1 // pred_check_branch
      %57 = sbr.rel (0) target = $region25
    $region24: #{tpu_custom_call.1} parent=1 // pred_region
      %59 = dma.done [#allocation3], 512
    $region25: #{tpu_custom_call.1} parent=1 // pred_fallthru
      _
    // Predicated region
    $region26: #{tpu_custom_call.1} parent=1 // pred_check
      _
    $region27: #{tpu_custom_call.1} parent=1 // pred_check_branch
      %61 = sbr.rel (0) target = $region29
    $region28: #{tpu_custom_call.1} parent=1 // pred_region
      %63 = dma.done [#allocation6], 2048
    $region29: #{tpu_custom_call.1} parent=1 // pred_fallthru
      _
    // Predicated region
    $region30: #{tpu_custom_call.1} parent=1 // pred_check
      _
    $region31: #{tpu_custom_call.1} parent=1 // pred_check_branch
      %65 = sbr.rel (0) target = $region33
    $region32: #{tpu_custom_call.1} parent=1 // pred_region
      %67 = dma.done [#allocation6], 2048
    $region33: #{tpu_custom_call.1} parent=1 // pred_fallthru
      _
    %v68 = vld [vmem:[#allocation2] sm:$0xff]
    %v69 = vld [vmem:[#allocation2 + $0x10] sm:$0xff]
    %v70 = vld [vmem:[#allocation2 + $0x8] sm:$0xff]
    %v71 = vld [vmem:[#allocation2 + $0x18] sm:$0xff]
    %v72 = vld [vmem:[#allocation5] sm:$0xff]
    %v73 = vld [vmem:[#allocation5 + $0x8] sm:$0xff]
    %v74 = vld [vmem:[#allocation5 + $0x10] sm:$0xff]
    %v75 = vld [vmem:[#allocation5 + $0x18] sm:$0xff]
    %v76 = vld [vmem:[#allocation5 + $0x20] sm:$0xff]
    %v77 = vld [vmem:[#allocation5 + $0x28] sm:$0xff]
    %v78 = vld [vmem:[#allocation5 + $0x30] sm:$0xff]
    %v79 = vld [vmem:[#allocation5 + $0x38] sm:$0xff]
    %v80 = vld [vmem:[#allocation5 + $0x40] sm:$0xff]
    %v81 = vld [vmem:[#allocation5 + $0x48] sm:$0xff]
    %v82 = vld [vmem:[#allocation5 + $0x50] sm:$0xff]
    %v83 = vld [vmem:[#allocation5 + $0x58] sm:$0xff]
    %v84 = vld [vmem:[#allocation5 + $0x60] sm:$0xff]
    %v85 = vld [vmem:[#allocation5 + $0x68] sm:$0xff]
    %v86 = vld [vmem:[#allocation5 + $0x70] sm:$0xff]
    %v87 = vld [vmem:[#allocation5 + $0x78] sm:$0xff]
    %88 = vmatpush.msra.mxu0 %v87
    %89 = vmatpush.msra.mxu0 %v86
    %90 = vmatpush.msra.mxu0 %v85
    %91 = vmatpush.msra.mxu0 %v84
    %92 = vmatpush.msra.mxu0 %v83
    %93 = vmatpush.msra.mxu0 %v82
    %94 = vmatpush.msra.mxu0 %v81
    %95 = vmatpush.msra.mxu0 %v80
    %96 = vmatpush.msra.mxu0 %v79
    %97 = vmatpush.msra.mxu0 %v78
    %98 = vmatpush.msra.mxu0 %v77
    %99 = vmatpush.msra.mxu0 %v76
    %100 = vmatpush.msra.mxu0 %v75
    %101 = vmatpush.msra.mxu0 %v74
    %102 = vmatpush.msra.mxu0 %v73
    %103 = vmatpush.msra.mxu0 %v72
    %104 = vmatmul.f32.gmra.mxu0 %v70
    %v105 = vpop.f32.mrf.mxu0
    %v106 = vadd.f32 0.0, %v105
    %107 = vmatmul.f32.gmra.mxu0 %v71
    %v108 = vpop.f32.mrf.mxu0
    %v109 = vadd.f32 0.0, %v108
    %110 = vdwg.mxu0
    %v111 = vadd.f32 %v68, %v106
    %v112 = vadd.f32 %v69, %v109
    %v113 = vld [vmem:[%s2] sm:$0x1]
    %v115 = vperm.slane %v113, 0
    %v117 = vadd.f32 %v111, %v115
    %v118 = vadd.f32 %v112, %v115
    %v119 = vld [vmem:[#allocation7] sm:$0xff]
    %v120 = vld [vmem:[#allocation7 + $0x8] sm:$0xff]
    %v121 = vld [vmem:[#allocation7 + $0x10] sm:$0xff]
    %v122 = vld [vmem:[#allocation7 + $0x18] sm:$0xff]
    %v123 = vld [vmem:[#allocation7 + $0x20] sm:$0xff]
    %v124 = vld [vmem:[#allocation7 + $0x28] sm:$0xff]
    %v125 = vld [vmem:[#allocation7 + $0x30] sm:$0xff]
    %v126 = vld [vmem:[#allocation7 + $0x38] sm:$0xff]
    %v127 = vld [vmem:[#allocation7 + $0x40] sm:$0xff]
    %v128 = vld [vmem:[#allocation7 + $0x48] sm:$0xff]
    %v129 = vld [vmem:[#allocation7 + $0x50] sm:$0xff]
    %v130 = vld [vmem:[#allocation7 + $0x58] sm:$0xff]
    %v131 = vld [vmem:[#allocation7 + $0x60] sm:$0xff]
    %v132 = vld [vmem:[#allocation7 + $0x68] sm:$0xff]
    %v133 = vld [vmem:[#allocation7 + $0x70] sm:$0xff]
    %v134 = vld [vmem:[#allocation7 + $0x78] sm:$0xff]
    %135 = vmatpush.msra.mxu0 %v134
    %136 = vmatpush.msra.mxu0 %v133
    %137 = vmatpush.msra.mxu0 %v132
    %138 = vmatpush.msra.mxu0 %v131
    %139 = vmatpush.msra.mxu0 %v130
    %140 = vmatpush.msra.mxu0 %v129
    %141 = vmatpush.msra.mxu0 %v128
    %142 = vmatpush.msra.mxu0 %v127
    %143 = vmatpush.msra.mxu0 %v126
    %144 = vmatpush.msra.mxu0 %v125
    %145 = vmatpush.msra.mxu0 %v124
    %146 = vmatpush.msra.mxu0 %v123
    %147 = vmatpush.msra.mxu0 %v122
    %148 = vmatpush.msra.mxu0 %v121
    %149 = vmatpush.msra.mxu0 %v120
    %150 = vmatpush.msra.mxu0 %v119
    %151 = vmatmul.f32.gmra.mxu0 %v117
    %v152 = vpop.f32.mrf.mxu0
    %v153 = vadd.f32 0.0, %v152
    %154 = vmatmul.f32.gmra.mxu0 %v118
    %v155 = vpop.f32.mrf.mxu0
    %v156 = vadd.f32 0.0, %v155
    %157 = vdwg.mxu0
    %v158 = vadd.f32 %v70, %v153
    %v159 = vadd.f32 %v71, %v156
    %v160 = vld [vmem:[%s4] sm:$0x1]
    %v162 = vperm.slane %v160, 0
    %v164 = vadd.f32 %v158, %v162
    %v165 = vadd.f32 %v159, %v162
    %166 = vst [vmem:[#allocation8] sm:$0xff] %v117
    %167 = vst [vmem:[#allocation8 + $0x10] sm:$0xff] %v118
    %168 = vst [vmem:[#allocation8 + $0x8] sm:$0xff] %v164
    %169 = vst [vmem:[#allocation8 + $0x18] sm:$0xff] %v165
    // Predicated region
    $region34: #{tpu_custom_call.1} parent=1 // pred_check
      _
    $region35: #{tpu_custom_call.1} parent=1 // pred_check_branch
      %171 = sbr.rel (0) target = $region37
    $region36: #{tpu_custom_call.1} parent=1 // pred_region
      %173 = vsyncadd [#allocation4], 0
      %s174 = sshll.u32 [#allocation8], 4
      %s175 = int_to_ptr.vmem [resolvable:$true] %s174
      %s176 = sshll.u32 %s5, 4
      %s177 = int_to_ptr.hbm [resolvable:$true] %s176
      %182 = dma.vmem_to_hbm [thread:$0]  %s175, 512, %s177, [#allocation4], 256, 256, 16
    $region37: #{tpu_custom_call.1} parent=1 // pred_fallthru
      _
    // Predicated region
    $region38: #{tpu_custom_call.1} parent=1 // pred_check
      _
    $region39: #{tpu_custom_call.1} parent=1 // pred_check_branch
      %184 = sbr.rel (0) target = $region41
    $region40: #{tpu_custom_call.1} parent=1 // pred_region
      %186 = dma.done [#allocation4], 512
    $region41: #{tpu_custom_call.1} parent=1 // pred_fallthru
      _
    %187 = vsyncpa [#allocation3], 1
    %188 = vsyncpa [#allocation6], 1
    %189 = vsyncpa [#allocation4], 1

</llo_original>
